<compile_context>
chip_gen: v5e
topology: v5e:2x2
jax: 0.10.0
libtpu: 0.0.40
codegen_flags: <defaults>
</compile_context>

<pallas_src>
import functools

import jax
import jax.numpy as jnp
from jax.experimental import pallas as pl
from jax.experimental.pallas import tpu as pltpu

EPS = 1e-12            # F.normalize eps
EPS_SQ = EPS * EPS     # guard applied to squared norms (rsqrt form)
MiB = 1024 * 1024


# ----------------------------------------------------------------------------
# Generation-aware VMEM budgeting
# ----------------------------------------------------------------------------
def _detect_vmem_capacity():
    try:
        info = pltpu.get_tpu_info()
        for attr in ("vmem_capacity_bytes", "vmem_bytes", "vmem_size_bytes"):
            val = getattr(info, attr, None)
            if val:
                return int(val)
    except Exception:
        pass
    return 64 * MiB  # conservative default (v7x per-TensorCore VMEM)


_VMEM_CAP = _detect_vmem_capacity()
_SMALL_VMEM = _VMEM_CAP <= 64 * MiB

# Row-tile caps: smaller on v7x (64 MiB VMEM/TC), larger on v5e/v6e (128 MiB).
_CAP_ENDEC = 256 if _SMALL_VMEM else 512
_CAP_SCORE = 128
_CAP_MP = 128 if _SMALL_VMEM else 256
_CAP_NXN = 128 if _SMALL_VMEM else 256
_CAP_Q = 512


def _row_tile(n, cap):
    """Row-tile size (multiple of 32 when tiled).

    When the whole array fits in one tile, still split it in two so the
    'parallel' grid axis has >=2 steps and both v7x TensorCores get work.
    """
    if n > cap:
        return cap
    half = -(-n // 2)
    half = -(-half // 32) * 32          # multiple of 32 (safe for bf16/int8 tiles)
    return n if half >= n else half


def _compiler_params(tiled_block_bytes, resident_bytes=0):
    """CompilerParams with an explicit VMEM limit sized from the block bytes."""
    need = 2 * int(tiled_block_bytes) + int(resident_bytes) + 4 * MiB
    lim = max(need, 32 * MiB)
    lim = min(lim, max(_VMEM_CAP - 8 * MiB, 32 * MiB))
    return pltpu.CompilerParams(
        dimension_semantics=("parallel",),
        vmem_limit_bytes=int(lim),
    )


def _row(i):
    return (i, 0)


def _full(i):
    return (0, 0)


# ----------------------------------------------------------------------------
# Kernel A: fused EnDecoder  (x -> x_pred, z_norm)
# ----------------------------------------------------------------------------
def _endec_kernel(x_ref, w0, b0, w1, b1, w2, b2, w3, b3, xp_ref, zn_ref):
    x = x_ref[...].astype(jnp.float32)

    def mm(a, w_ref, b_ref):
        # weights are pre-cast to bf16 in the wrapper (grid-resident);
        # activations cast per tile; f32 accumulation on the MXU.
        return (jnp.dot(a.astype(jnp.bfloat16), w_ref[...],
                        preferred_element_type=jnp.float32)
                + b_ref[...])

    h1 = jnp.tanh(mm(x, w0, b0))
    z = mm(h1, w1, b1)
    zn = z * jax.lax.rsqrt(jnp.maximum(jnp.sum(z * z, axis=1, keepdims=True),
                                       EPS_SQ))
    hd = jnp.tanh(mm(zn, w2, b2))
    y = mm(hd, w3, b3)
    xp = 1.0 / (1.0 + jnp.exp(-y))     # sigmoid kept in f32

    xp_ref[...] = xp.astype(xp_ref.dtype)
    zn_ref[...] = zn.astype(zn_ref.dtype)


def endec_forward(x, p):
    n, f = x.shape
    d = p["enc_w1"].shape[1]
    tm = _row_tile(n, _CAP_ENDEC)
    args = [x]
    w_specs = []
    resident = 0
    for wname, bname in (("enc_w0", "enc_b0"), ("enc_w1", "enc_b1"),
                         ("dec_w0", "dec_b0"), ("dec_w1", "dec_b1")):
        w = p[wname].astype(jnp.bfloat16)                 # cast once (resident)
        b = p[bname].reshape(1, -1).astype(jnp.float32)
        args += [w, b]
        w_specs += [pl.BlockSpec(w.shape, _full), pl.BlockSpec(b.shape, _full)]
        resident += w.size * 2 + b.size * 4
    tiled = tm * f * 4 * 2 + tm * d * 4
    return pl.pallas_call(
        _endec_kernel,
        out_shape=(jax.ShapeDtypeStruct((n, f), x.dtype),
                   jax.ShapeDtypeStruct((n, d), x.dtype)),
        grid=(pl.cdiv(n, tm),),
        in_specs=[pl.BlockSpec((tm, f), _row)] + w_specs,
        out_specs=(pl.BlockSpec((tm, f), _row), pl.BlockSpec((tm, d), _row)),
        compiler_params=_compiler_params(tiled, resident),
    )(*args)


# ----------------------------------------------------------------------------
# Kernel B: fused similarity + Score post-processing + adj_S
#           (+ bf16 mp copy of adj_S, its row 1/||.||_2 and per-row min/max)
# ----------------------------------------------------------------------------
def _score_fuse_kernel(w_adj, z_tile_ref, z_full_ref, adj_ref,
                       score_ref, dis_ref, arec_ref, arecn_ref,
                       adjs_ref, adjs_bf_ref, rinv_ref, stats_ref):
    z_t = z_tile_ref[...].astype(jnp.float32)
    z_f = z_full_ref[...].astype(jnp.float32)
    # Score = z z^T kept in f32: it feeds hard thresholds downstream
    score = jax.lax.dot_general(z_t, z_f, (((1,), (1,)), ((), ())),
                                preferred_element_type=jnp.float32)
    row_mean = jnp.mean(score, axis=1, keepdims=True)
    a_rec = (score > 0.5).astype(jnp.float32)
    rs = jnp.sum(a_rec, axis=1, keepdims=True)
    r_inv = jnp.where(rs == 0.0, 0.0, 1.0 / rs)            # normalize_adj (inf->0)
    adj_s = score + w_adj * adj_ref[...].astype(jnp.float32)
    rmin = jnp.min(adj_s, axis=1, keepdims=True)
    rmax = jnp.max(adj_s, axis=1, keepdims=True)
    inv_l2 = jax.lax.rsqrt(
        jnp.maximum(jnp.sum(adj_s * adj_s, axis=1, keepdims=True), EPS_SQ))
    lane = jax.lax.broadcasted_iota(jnp.int32, stats_ref.shape, 1)

    score_ref[...] = score.astype(score_ref.dtype)
    dis_ref[...] = (score > row_mean).astype(dis_ref.dtype)      # bf16 mask
    arec_ref[...] = a_rec.astype(arec_ref.dtype)                 # bf16 mask
    arecn_ref[...] = (a_rec * r_inv).astype(arecn_ref.dtype)
    adjs_ref[...] = adj_s.astype(adjs_ref.dtype)
    adjs_bf_ref[...] = adj_s.astype(jnp.bfloat16)                # mp stream copy
    rinv_ref[...] = inv_l2
    # lanes [0,64): per-row min of adj_S, lanes [64,128): per-row max
    stats_ref[...] = jnp.where(lane < 64, rmin, rmax)


def score_fuse(z_norm, adj, w):
    n, d = z_norm.shape
    tm = _row_tile(n, _CAP_SCORE)
    nxn = lambda dt: jax.ShapeDtypeStruct((n, n), dt)
    out_shape = (nxn(jnp.float32),                               # Score
                 nxn(jnp.bfloat16),                              # Score_dis
                 nxn(jnp.bfloat16),                              # A_rec
                 nxn(jnp.float32),                               # A_rec_norm
                 nxn(jnp.float32),                               # adj_S
                 nxn(jnp.bfloat16),                              # adj_S (bf16)
                 jax.ShapeDtypeStruct((n, 1), jnp.float32),      # 1/||adj_S row||
                 jax.ShapeDtypeStruct((n, 128), jnp.float32))    # min/max lanes
    out_specs = (pl.BlockSpec((tm, n), _row), pl.BlockSpec((tm, n), _row),
                 pl.BlockSpec((tm, n), _row), pl.BlockSpec((tm, n), _row),
                 pl.BlockSpec((tm, n), _row), pl.BlockSpec((tm, n), _row),
                 pl.BlockSpec((tm, 1), _row), pl.BlockSpec((tm, 128), _row))
    tiled = (tm * d * 4 + tm * n * 4
             + tm * n * (4 + 2 + 2 + 4 + 4 + 2) + tm * 4 + tm * 128 * 4)
    resident = n * d * 4
    return pl.pallas_call(
        functools.partial(_score_fuse_kernel, float(w)),
        out_shape=out_shape,
        grid=(pl.cdiv(n, tm),),
        # NOTE: z_norm is fed twice (tiled + resident); the extra (n,d) stream
        # is tiny and avoids OOB slicing of the resident block on partial tiles.
        in_specs=[pl.BlockSpec((tm, d), _row),
                  pl.BlockSpec((n, d), _full),
                  pl.BlockSpec((tm, n), _row)],
        out_specs=out_specs,
        compiler_params=_compiler_params(tiled, resident),
    )(z_norm, z_norm, adj)


# ----------------------------------------------------------------------------
# Kernel C: 'acm'/'dblp'/'imdb' branch — min-max scale, square, threshold,
#           row-norm (+ bf16 mp copy and row 1/||.||_2 of the normalized mat)
# ----------------------------------------------------------------------------
def _adj_rec_kernel(adjs_ref, mm_ref, rec_ref, recn_ref, recn_bf_ref, rinv_ref):
    a = adjs_ref[...].astype(jnp.float32)
    mn = mm_ref[0, 0]
    mx = mm_ref[0, 1]
    denom = mx - mn
    # guard constant matrix (PyTorch min-max scaling would produce NaN here)
    inv_den = jnp.where(denom == 0.0, 0.0, 1.0 / denom)
    mapped = (a - mn) * inv_den
    mapped = mapped * mapped
    rec = (mapped > 0.5).astype(jnp.float32)
    cnt = jnp.sum(rec, axis=1, keepdims=True)
    r_inv = jnp.where(cnt == 0.0, 0.0, 1.0 / cnt)
    recn = rec * r_inv
    # ||recn row||_2 = 1/sqrt(cnt)  ->  1/||.||_2 = sqrt(cnt)  (0 when cnt=0)
    inv_l2 = jnp.sqrt(cnt)
    rec_ref[...] = rec.astype(rec_ref.dtype)                     # bf16 mask
    recn_ref[...] = recn.astype(recn_ref.dtype)
    recn_bf_ref[...] = recn.astype(jnp.bfloat16)                 # mp stream copy
    rinv_ref[...] = inv_l2


def adj_s_rec(adj_s, minmax):
    n = adj_s.shape[0]
    tm = _row_tile(n, _CAP_NXN)
    tiled = tm * n * 4 + tm * n * (2 + 4 + 2) + tm * 4
    return pl.pallas_call(
        _adj_rec_kernel,
        out_shape=(jax.ShapeDtypeStruct((n, n), jnp.bfloat16),   # adj_S_rec
                   jax.ShapeDtypeStruct((n, n), jnp.float32),    # adj_S_rec_norm
                   jax.ShapeDtypeStruct((n, n), jnp.bfloat16),   # bf16 mp copy
                   jax.ShapeDtypeStruct((n, 1), jnp.float32)),   # 1/||row||_2
        grid=(pl.cdiv(n, tm),),
        in_specs=[pl.BlockSpec((tm, n), _row),
                  pl.BlockSpec(memory_space=pltpu.MemorySpace.SMEM)],
        out_specs=(pl.BlockSpec((tm, n), _row), pl.BlockSpec((tm, n), _row),
                   pl.BlockSpec((tm, n), _row), pl.BlockSpec((tm, 1), _row)),
        compiler_params=_compiler_params(tiled),
    )(adj_s, minmax)


# ----------------------------------------------------------------------------
# normalize_adj ('chameleon'/'cornell'/'wisconsin' branch) + bf16 copy + rinv
# ----------------------------------------------------------------------------
def _norm_adj_kernel(x_ref, o_ref, o_bf_ref, rinv_ref):
    x = x_ref[...].astype(jnp.float32)
    rs = jnp.sum(x, axis=1, keepdims=True)
    r_inv = jnp.where(rs == 0.0, 0.0, 1.0 / rs)
    y = x * r_inv
    inv_l2 = jax.lax.rsqrt(
        jnp.maximum(jnp.sum(y * y, axis=1, keepdims=True), EPS_SQ))
    o_ref[...] = y.astype(o_ref.dtype)
    o_bf_ref[...] = y.astype(jnp.bfloat16)
    rinv_ref[...] = inv_l2


def normalize_adj(x):
    n = x.shape[0]
    tm = _row_tile(n, _CAP_NXN)
    tiled = tm * n * (4 + 4 + 2) + tm * 4
    return pl.pallas_call(
        _norm_adj_kernel,
        out_shape=(jax.ShapeDtypeStruct((n, n), jnp.float32),
                   jax.ShapeDtypeStruct((n, n), jnp.bfloat16),
                   jax.ShapeDtypeStruct((n, 1), jnp.float32)),
        grid=(pl.cdiv(n, tm),),
        in_specs=[pl.BlockSpec((tm, n), _row)],
        out_specs=(pl.BlockSpec((tm, n), _row), pl.BlockSpec((tm, n), _row),
                   pl.BlockSpec((tm, 1), _row)),
        compiler_params=_compiler_params(tiled),
    )(x)


# ----------------------------------------------------------------------------
# Kernel D: one graph-message-passing step  h <- L2rownorm(adj) @ h + x
#   * adjacency streamed in bf16, its row L2-norm precomputed by the producer
#   * h resident in bf16, intermediates written back in bf16
#   * last step can fuse the output F.normalize (optionally per column block
#     for the shared X|Z pass) and, for the h pass, predict_distribution (q)
# ----------------------------------------------------------------------------
def _mp_step_kernel(mode, split_at, *refs):
    adj_ref, rinv_ref, h_ref, x_ref = refs[:4]
    rest = refs[4:]
    y = jnp.dot(adj_ref[...], h_ref[...], preferred_element_type=jnp.float32)
    y = y * rinv_ref[...] + x_ref[...].astype(jnp.float32)

    def _l2(v):
        return v * jax.lax.rsqrt(
            jnp.maximum(jnp.sum(v * v, axis=1, keepdims=True), EPS_SQ))

    if mode == 0:                                   # intermediate step (bf16)
        o_ref, = rest
        o_ref[...] = y.astype(o_ref.dtype)
    elif mode == 1:                                 # final, fused F.normalize
        o_ref, = rest
        o_ref[...] = _l2(y).astype(o_ref.dtype)
    elif mode == 2:                                 # final, split X|Z + normalize
        o0, o1 = rest
        o0[...] = _l2(y[:, :split_at]).astype(o0.dtype)
        o1[...] = _l2(y[:, split_at:]).astype(o1.dtype)
    else:                                           # final + fused cluster q
        c_ref, cc_ref, oh_ref, oq_ref = rest
        hn = _l2(y)
        c = c_ref[...].astype(jnp.float32)
        zc = jax.lax.dot_general(hn, c, (((1,), (1,)), ((), ())),
                                 preferred_element_type=jnp.float32)
        zz = jnp.sum(hn * hn, axis=1, keepdims=True)
        dist = jnp.maximum(zz - 2.0 * zc + cc_ref[...], 0.0)
        q = pl.reciprocal(1.0 + dist, approx=True)              # EUP
        q = q / jnp.sum(q, axis=1, keepdims=True)               # exact: rows sum to 1
        oh_ref[...] = hn.astype(oh_ref.dtype)
        oq_ref[...] = q.astype(oq_ref.dtype)


def _mp_step(adj_bf16, rinv, h, x, out_dtype, mode, split_at=None,
             cluster=None, tile_cap=_CAP_MP):
    n = adj_bf16.shape[0]
    k = h.shape[1]
    tm = _row_tile(n, tile_cap)
    in_specs = [pl.BlockSpec((tm, n), _row),       # adjacency tile (bf16)
                pl.BlockSpec((tm, 1), _row),       # 1/||adj row||_2
                pl.BlockSpec((n, k), _full),       # resident h (bf16)
                pl.BlockSpec((tm, k), _row)]       # residual x (bf16)
    args = [adj_bf16, rinv, h, x]
    resident = n * k * 2
    tiled = tm * n * 2 + tm * 4 + tm * k * 2
    if mode == 0:
        out_shape = jax.ShapeDtypeStruct((n, k), jnp.bfloat16)
        out_specs = pl.BlockSpec((tm, k), _row)
        tiled += tm * k * 2
    elif mode == 1:
        out_shape = jax.ShapeDtypeStruct((n, k), out_dtype)
        out_specs = pl.BlockSpec((tm, k), _row)
        tiled += tm * k * 4
    elif mode == 2:
        out_shape = (jax.ShapeDtypeStruct((n, split_at), out_dtype),
                     jax.ShapeDtypeStruct((n, k - split_at), out_dtype))
        out_specs = (pl.BlockSpec((tm, split_at), _row),
                     pl.BlockSpec((tm, k - split_at), _row))
        tiled += tm * k * 4
    else:
        c, cc = cluster
        cnum = c.shape[0]
        args += [c, cc]
        in_specs += [pl.BlockSpec(c.shape, _full), pl.BlockSpec(cc.shape, _full)]
        out_shape = (jax.ShapeDtypeStruct((n, k), out_dtype),
                     jax.ShapeDtypeStruct((n, cnum), out_dtype))
        out_specs = (pl.BlockSpec((tm, k), _row),
                     pl.BlockSpec((tm, cnum), _row))
        tiled += tm * k * 4 + tm * cnum * 4
        resident += c.size * 4 + cc.size * 4
    return pl.pallas_call(
        functools.partial(_mp_step_kernel, mode, split_at),
        out_shape=out_shape,
        grid=(pl.cdiv(n, tm),),
        in_specs=in_specs,
        out_specs=out_specs,
        compiler_params=_compiler_params(tiled, resident),
    )(*args)


def graph_encode(x, adj_bf16, rinv, order, split_at=None, cluster=None,
                 tile_cap=_CAP_MP):
    """GraphEncoder.forward + fused output F.normalize (and optionally q).

    `x` is the f32 feature matrix; the adjacency is the bf16 copy plus its
    precomputed per-row 1/||.||_2 (so F.normalize(adj) never materializes).
    If `split_at` is given, x is [X | Z] sharing the adjacency; the final L2
    norm is applied per block.  If `cluster=(c, cc)` is given, the Student-t
    cluster assignment q is fused into the last step.
    """
    assert order >= 1
    out_dtype = x.dtype
    x_bf = x.astype(jnp.bfloat16)          # cast once; mp intermediates stay bf16
    h = x_bf
    for step in range(order):
        last = step == order - 1
        if not last:
            h = _mp_step(adj_bf16, rinv, h, x_bf, out_dtype, mode=0,
                         tile_cap=tile_cap)
        else:
            if cluster is not None:
                mode = 3
            elif split_at is not None:
                mode = 2
            else:
                mode = 1
            return _mp_step(adj_bf16, rinv, h, x_bf, out_dtype, mode=mode,
                            split_at=split_at, cluster=cluster,
                            tile_cap=tile_cap)


# ----------------------------------------------------------------------------
# Kernel E: standalone predict_distribution (used for the combined h_all)
# ----------------------------------------------------------------------------
def _predict_q_kernel(z_ref, c_ref, cc_ref, o_ref):
    z = z_ref[...].astype(jnp.float32)
    c = c_ref[...].astype(jnp.float32)
    zc = jax.lax.dot_general(z, c, (((1,), (1,)), ((), ())),
                             preferred_element_type=jnp.float32)
    zz = jnp.sum(z * z, axis=1, keepdims=True)
    d = jnp.maximum(zz - 2.0 * zc + cc_ref[...].astype(jnp.float32), 0.0)
    q = pl.reciprocal(1.0 + d, approx=True)
    q = q / jnp.sum(q, axis=1, keepdims=True)       # exact normalization
    o_ref[...] = q.astype(o_ref.dtype)


def predict_distribution(z, c):
    n, d = z.shape
    cnum = c.shape[0]
    cc = jnp.sum(c * c, axis=1, keepdims=True).T.astype(jnp.float32)   # (1, C)
    tm = _row_tile(n, _CAP_Q)
    tiled = tm * d * 4 + tm * cnum * 4
    resident = c.size * 4 + cc.size * 4
    return pl.pallas_call(
        _predict_q_kernel,
        out_shape=jax.ShapeDtypeStruct((n, cnum), z.dtype),
        grid=(pl.cdiv(n, tm),),
        in_specs=[pl.BlockSpec((tm, d), _row),
                  pl.BlockSpec((cnum, d), _full),
                  pl.BlockSpec((1, cnum), _full)],
        out_specs=pl.BlockSpec((tm, cnum), _row),
        compiler_params=_compiler_params(tiled, resident),
    )(z, c, cc)


# ----------------------------------------------------------------------------
# Glue: noise, parameter init, full MVHGC forward
# ----------------------------------------------------------------------------
def add_noise(x, noise_mode, key):
    if noise_mode == 0:
        mask = (jax.random.uniform(key, x.shape) < 0.2).astype(x.dtype)
        return x * (1.0 - mask)
    noise = jax.random.normal(key, x.shape, x.dtype) * 0.2
    return x + noise


def _linear_init(key, din, dout):
    kw, kb = jax.random.split(key)
    bound = 1.0 / float(din) ** 0.5
    w = jax.random.uniform(kw, (din, dout), jnp.float32, -bound, bound)
    b = jax.random.uniform(kb, (dout,), jnp.float32, -bound, bound)
    return w, b


def init_params(key, feat_dim, hidden_dim, latent_dim, class_num, num_view):
    params = {"views": [], "clusters": []}
    for v in range(num_view):
        ks = jax.random.split(jax.random.fold_in(key, v), 4)
        enc_w0, enc_b0 = _linear_init(ks[0], feat_dim, hidden_dim)
        enc_w1, enc_b1 = _linear_init(ks[1], hidden_dim, latent_dim)
        dec_w0, dec_b0 = _linear_init(ks[2], latent_dim, hidden_dim)
        dec_w1, dec_b1 = _linear_init(ks[3], hidden_dim, feat_dim)
        params["views"].append(dict(
            enc_w0=enc_w0, enc_b0=enc_b0, enc_w1=enc_w1, enc_b1=enc_b1,
            dec_w0=dec_w0, dec_b0=dec_b0, dec_w1=dec_w1, dec_b1=dec_b1))
    for v in range(num_view + 1):
        kc = jax.random.fold_in(key, 1000 + v)
        params["clusters"].append(
            jax.random.normal(kc, (class_num, latent_dim), jnp.float32) * 0.1)
    return params


def mvhgc_forward(params, Xs, adjs, weights_h, noise_mode, dataset, ws, key,
                  order, num_view):
    x_preds, z_norms, A_recs, A_rec_norms = [], [], [], []
    Scores, Scores_dis, hs, qgs = [], [], [], []
    adj_Ss, adj_Ss_rec, adj_Ss_rec_norm = [], [], []
    Xs_recovery, Zs_recovery = [], []

    keys = jax.random.split(key, 2 * num_view)

    for v in range(num_view):
        p = params["views"][v]
        feat_dim = Xs[v].shape[1]

        # ---- fused EnDecoder (dropout = identity in eval mode) ----
        x_pred, z_norm = endec_forward(Xs[v], p)
        x_preds.append(x_pred)
        z_norms.append(z_norm)

        # ---- fused similarity + thresholds + A_rec_norm + adj_S (single pass) ----
        (Score, Score_dis, A_rec, A_rec_norm, adj_S, adj_S_bf16,
         adjS_rinv, stats) = score_fuse(z_norm, adjs[v], ws[v])
        Scores.append(Score)
        Scores_dis.append(Score_dis)
        A_recs.append(A_rec)
        A_rec_norms.append(A_rec_norm)
        adj_Ss.append(adj_S)

        if dataset in ("texas",):
            adj_S_rec_norm = adj_S
            mp_adj, mp_rinv = adj_S_bf16, adjS_rinv
        elif dataset in ("chameleon", "cornell", "wisconsin"):
            adj_S_rec_norm, mp_adj, mp_rinv = normalize_adj(adj_S)
        else:  # 'acm', 'dblp', 'imdb'
            g_min = jnp.min(stats[:, :64])
            g_max = jnp.max(stats[:, 64:])
            minmax = jnp.stack([g_min, g_max]).reshape(1, 2).astype(jnp.float32)
            adj_S_rec, adj_S_rec_norm, mp_adj, mp_rinv = adj_s_rec(adj_S, minmax)
            adj_Ss_rec.append(adj_S_rec)
        adj_Ss_rec_norm.append(adj_S_rec_norm)

        # ---- graph encoder for h; output F.normalize AND the per-view cluster
        #      assignment q are fused into the last message-passing step ----
        c_v = params["clusters"][v]
        cc_v = jnp.sum(c_v * c_v, axis=1, keepdims=True).T.astype(jnp.float32)
        h, qg = graph_encode(z_norm, mp_adj, mp_rinv, order,
                             cluster=(c_v, cc_v))
        hs.append(h)
        qgs.append(qg)
        # NOTE: reference's h_from_S / h_from_A are never returned -> dropped.

        # ---- GCN recovery: X and Z share one adjacency stream over adj_S ----
        # (reference re-samples noise num_view times and keeps only the last draw)
        noise_X = add_noise(Xs[v], noise_mode, keys[2 * v])
        noise_Z = add_noise(z_norm, noise_mode, keys[2 * v + 1])
        xz = jnp.concatenate([noise_X, noise_Z], axis=1)
        Xr, Zr = graph_encode(xz, adj_S_bf16, adjS_rinv, order,
                              split_at=feat_dim)
        Xs_recovery.append(Xr)
        Zs_recovery.append(Zr)

    h_all = sum(weights_h[v] * hs[v] for v in range(num_view)) / sum(weights_h)
    qgs.append(predict_distribution(h_all, params["clusters"][-1]))

    return (x_preds, z_norms, A_recs, A_rec_norms, Scores, Scores_dis, hs,
            h_all, qgs, adj_Ss, adj_Ss_rec, adj_Ss_rec_norm, Xs_recovery,
            Zs_recovery)


# ----------------------------------------------------------------------------
if __name__ == "__main__":
    num_view = 2
    N = 8            # nodes
    feat_dim = 16
    hidden_dim = 32
    latent_dim = 16
    class_num = 4
    order = 2

    root = jax.random.PRNGKey(0)
    k_params, k_x, k_adj, k_noise = jax.random.split(root, 4)

    params = init_params(k_params, feat_dim, hidden_dim, latent_dim,
                         class_num, num_view)

    Xs = [jax.random.normal(jax.random.fold_in(k_x, v), (N, feat_dim),
                            jnp.float32) for v in range(num_view)]
    adjs = [(jax.random.uniform(jax.random.fold_in(k_adj, v), (N, N))
             < 0.3).astype(jnp.float32) for v in range(num_view)]

    weights_h = [1.0, 0.8]
    ws = [0.5, 0.3]
    noise_mode = 0
    dataset = "acm"

    out = mvhgc_forward(params, Xs, adjs, weights_h, noise_mode, dataset, ws,
                        k_noise, order, num_view)
    jax.block_until_ready(out)

    h_all = out[7]
    q_all = out[8][-1]
    assert bool(jnp.all(jnp.isfinite(h_all))), "h_all has non-finite values"
    assert bool(jnp.all(jnp.isfinite(q_all))), "q has non-finite values"
    print("KERNEL_OK")
</pallas_src>

<mosaic_0001>
module attributes {stable_mosaic.version = 11 : i64} {
  func.func @_endec_kernel(%arg0: i32, %arg1: memref<8x16xf32, #tpu.memory_space<vmem>>, %arg2: memref<16x32xbf16, #tpu.memory_space<vmem>>, %arg3: memref<1x32xf32, #tpu.memory_space<vmem>>, %arg4: memref<32x16xbf16, #tpu.memory_space<vmem>>, %arg5: memref<1x16xf32, #tpu.memory_space<vmem>>, %arg6: memref<16x32xbf16, #tpu.memory_space<vmem>>, %arg7: memref<1x32xf32, #tpu.memory_space<vmem>>, %arg8: memref<32x16xbf16, #tpu.memory_space<vmem>>, %arg9: memref<1x16xf32, #tpu.memory_space<vmem>>, %arg10: memref<8x16xf32, #tpu.memory_space<vmem>>, %arg11: memref<8x16xf32, #tpu.memory_space<vmem>>) attributes {dimension_semantics = [#tpu.dimension_semantics<parallel>], iteration_bounds = array<i64: 1>, scalar_prefetch = 0 : i64, scratch_operands = 0 : i64, tpu.core_type = #tpu.core_type<tc>, window_params = [{transform_indices = @transform_0, window_bounds = array<i64: 8, 16>}, {pipeline_mode = #tpu.pipeline_mode<synchronous>, transform_indices = @transform_1, window_bounds = array<i64: 16, 32>}, {pipeline_mode = #tpu.pipeline_mode<synchronous>, transform_indices = @transform_2, window_bounds = array<i64: 1, 32>}, {pipeline_mode = #tpu.pipeline_mode<synchronous>, transform_indices = @transform_3, window_bounds = array<i64: 32, 16>}, {pipeline_mode = #tpu.pipeline_mode<synchronous>, transform_indices = @transform_4, window_bounds = array<i64: 1, 16>}, {pipeline_mode = #tpu.pipeline_mode<synchronous>, transform_indices = @transform_5, window_bounds = array<i64: 16, 32>}, {pipeline_mode = #tpu.pipeline_mode<synchronous>, transform_indices = @transform_6, window_bounds = array<i64: 1, 32>}, {pipeline_mode = #tpu.pipeline_mode<synchronous>, transform_indices = @transform_7, window_bounds = array<i64: 32, 16>}, {pipeline_mode = #tpu.pipeline_mode<synchronous>, transform_indices = @transform_8, window_bounds = array<i64: 1, 16>}, {transform_indices = @transform_9, window_bounds = array<i64: 8, 16>}, {transform_indices = @transform_10, window_bounds = array<i64: 8, 16>}]} {
    %c0 = arith.constant 0 : index
    %c0_0 = arith.constant 0 : index
    %0 = vector.load %arg1[%c0, %c0_0] : memref<8x16xf32, #tpu.memory_space<vmem>>, vector<8x16xf32>
    %1 = arith.truncf %0 : vector<8x16xf32> to vector<8x16xbf16>
    %c0_1 = arith.constant 0 : index
    %c0_2 = arith.constant 0 : index
    %2 = vector.load %arg2[%c0_1, %c0_2] : memref<16x32xbf16, #tpu.memory_space<vmem>>, vector<16x32xbf16>
    %cst = arith.constant dense<0.000000e+00> : vector<8x32xf32>
    %3 = tpu.matmul %1, %2, %cst {dimension_numbers = #tpu.dot_dimension_numbers<[1], [0], [0], [1], [0, 0, 1, 1], [], []>} : vector<8x16xbf16>, vector<16x32xbf16>, vector<8x32xf32> -> vector<8x32xf32>
    %c0_3 = arith.constant 0 : index
    %c0_4 = arith.constant 0 : index
    %4 = vector.load %arg3[%c0_3, %c0_4] : memref<1x32xf32, #tpu.memory_space<vmem>>, vector<1x32xf32>
    %5 = vector.broadcast %4 : vector<1x32xf32> to vector<8x32xf32>
    %6 = arith.addf %3, %5 : vector<8x32xf32>
    %7 = math.tanh %6 : vector<8x32xf32>
    %8 = arith.truncf %7 : vector<8x32xf32> to vector<8x32xbf16>
    %c0_5 = arith.constant 0 : index
    %c0_6 = arith.constant 0 : index
    %9 = vector.load %arg4[%c0_5, %c0_6] : memref<32x16xbf16, #tpu.memory_space<vmem>>, vector<32x16xbf16>
    %cst_7 = arith.constant dense<0.000000e+00> : vector<8x16xf32>
    %10 = tpu.matmul %8, %9, %cst_7 {dimension_numbers = #tpu.dot_dimension_numbers<[1], [0], [0], [1], [0, 0, 1, 1], [], []>} : vector<8x32xbf16>, vector<32x16xbf16>, vector<8x16xf32> -> vector<8x16xf32>
    %c0_8 = arith.constant 0 : index
    %c0_9 = arith.constant 0 : index
    %11 = vector.load %arg5[%c0_8, %c0_9] : memref<1x16xf32, #tpu.memory_space<vmem>>, vector<1x16xf32>
    %12 = vector.broadcast %11 : vector<1x16xf32> to vector<8x16xf32>
    %13 = arith.addf %10, %12 : vector<8x16xf32>
    %14 = arith.mulf %13, %13 : vector<8x16xf32>
    %cst_10 = arith.constant dense<0.000000e+00> : vector<8xf32>
    %15 = vector.multi_reduction <add>, %14, %cst_10 [1] : vector<8x16xf32> to vector<8xf32>
    %16 = vector.shape_cast %15 : vector<8xf32> to vector<8x1xf32>
    %cst_11 = arith.constant 1.000000e-24 : f32
    %17 = vector.broadcast %cst_11 : f32 to vector<8x1xf32>
    %18 = arith.maximumf %16, %17 : vector<8x1xf32>
    %19 = math.rsqrt %18 : vector<8x1xf32>
    %20 = vector.broadcast %19 : vector<8x1xf32> to vector<8x16xf32>
    %21 = arith.mulf %13, %20 : vector<8x16xf32>
    %22 = arith.truncf %21 : vector<8x16xf32> to vector<8x16xbf16>
    %c0_12 = arith.constant 0 : index
    %c0_13 = arith.constant 0 : index
    %23 = vector.load %arg6[%c0_12, %c0_13] : memref<16x32xbf16, #tpu.memory_space<vmem>>, vector<16x32xbf16>
    %cst_14 = arith.constant dense<0.000000e+00> : vector<8x32xf32>
    %24 = tpu.matmul %22, %23, %cst_14 {dimension_numbers = #tpu.dot_dimension_numbers<[1], [0], [0], [1], [0, 0, 1, 1], [], []>} : vector<8x16xbf16>, vector<16x32xbf16>, vector<8x32xf32> -> vector<8x32xf32>
    %c0_15 = arith.constant 0 : index
    %c0_16 = arith.constant 0 : index
    %25 = vector.load %arg7[%c0_15, %c0_16] : memref<1x32xf32, #tpu.memory_space<vmem>>, vector<1x32xf32>
    %26 = vector.broadcast %25 : vector<1x32xf32> to vector<8x32xf32>
    %27 = arith.addf %24, %26 : vector<8x32xf32>
    %28 = math.tanh %27 : vector<8x32xf32>
    %29 = arith.truncf %28 : vector<8x32xf32> to vector<8x32xbf16>
    %c0_17 = arith.constant 0 : index
    %c0_18 = arith.constant 0 : index
    %30 = vector.load %arg8[%c0_17, %c0_18] : memref<32x16xbf16, #tpu.memory_space<vmem>>, vector<32x16xbf16>
    %cst_19 = arith.constant dense<0.000000e+00> : vector<8x16xf32>
    %31 = tpu.matmul %29, %30, %cst_19 {dimension_numbers = #tpu.dot_dimension_numbers<[1], [0], [0], [1], [0, 0, 1, 1], [], []>} : vector<8x32xbf16>, vector<32x16xbf16>, vector<8x16xf32> -> vector<8x16xf32>
    %c0_20 = arith.constant 0 : index
    %c0_21 = arith.constant 0 : index
    %32 = vector.load %arg9[%c0_20, %c0_21] : memref<1x16xf32, #tpu.memory_space<vmem>>, vector<1x16xf32>
    %33 = vector.broadcast %32 : vector<1x16xf32> to vector<8x16xf32>
    %34 = arith.addf %31, %33 : vector<8x16xf32>
    %cst_22 = arith.constant 0.000000e+00 : f32
    %35 = vector.broadcast %cst_22 : f32 to vector<8x16xf32>
    %36 = arith.subf %35, %34 : vector<8x16xf32>
    %37 = math.exp %36 : vector<8x16xf32>
    %cst_23 = arith.constant 1.000000e+00 : f32
    %38 = vector.broadcast %cst_23 : f32 to vector<8x16xf32>
    %39 = arith.addf %38, %37 : vector<8x16xf32>
    %cst_24 = arith.constant 1.000000e+00 : f32
    %40 = vector.broadcast %cst_24 : f32 to vector<8x16xf32>
    %41 = arith.divf %40, %39 : vector<8x16xf32>
    %c0_25 = arith.constant 0 : index
    %c0_26 = arith.constant 0 : index
    %42 = vector.load %arg10[%c0_25, %c0_26] : memref<8x16xf32, #tpu.memory_space<vmem>>, vector<8x16xf32>
    tpu.vector_store %arg10[%c0_25, %c0_26], %41 {strides = array<i32>} : memref<8x16xf32, #tpu.memory_space<vmem>>, vector<8x16xf32>,
    %c0_27 = arith.constant 0 : index
    %c0_28 = arith.constant 0 : index
    %43 = vector.load %arg11[%c0_27, %c0_28] : memref<8x16xf32, #tpu.memory_space<vmem>>, vector<8x16xf32>
    tpu.vector_store %arg11[%c0_27, %c0_28], %21 {strides = array<i32>} : memref<8x16xf32, #tpu.memory_space<vmem>>, vector<8x16xf32>,
    return
  }
  func.func @transform_0(%arg0: i32) -> (i32, i32) {
    %c0_i32 = arith.constant 0 : i32
    %c0_i32_0 = arith.constant 0 : i32
    return %arg0, %c0_i32 : i32, i32
  }
  func.func @transform_1(%arg0: i32) -> (i32, i32) {
    %c0_i32 = arith.constant 0 : i32
    %c0_i32_0 = arith.constant 0 : i32
    %c0_i32_1 = arith.constant 0 : i32
    return %c0_i32, %c0_i32_0 : i32, i32
  }
  func.func @transform_2(%arg0: i32) -> (i32, i32) {
    %c0_i32 = arith.constant 0 : i32
    %c0_i32_0 = arith.constant 0 : i32
    %c0_i32_1 = arith.constant 0 : i32
    return %c0_i32, %c0_i32_0 : i32, i32
  }
  func.func @transform_3(%arg0: i32) -> (i32, i32) {
    %c0_i32 = arith.constant 0 : i32
    %c0_i32_0 = arith.constant 0 : i32
    %c0_i32_1 = arith.constant 0 : i32
    return %c0_i32, %c0_i32_0 : i32, i32
  }
  func.func @transform_4(%arg0: i32) -> (i32, i32) {
    %c0_i32 = arith.constant 0 : i32
    %c0_i32_0 = arith.constant 0 : i32
    %c0_i32_1 = arith.constant 0 : i32
    return %c0_i32, %c0_i32_0 : i32, i32
  }
  func.func @transform_5(%arg0: i32) -> (i32, i32) {
    %c0_i32 = arith.constant 0 : i32
    %c0_i32_0 = arith.constant 0 : i32
    %c0_i32_1 = arith.constant 0 : i32
    return %c0_i32, %c0_i32_0 : i32, i32
  }
  func.func @transform_6(%arg0: i32) -> (i32, i32) {
    %c0_i32 = arith.constant 0 : i32
    %c0_i32_0 = arith.constant 0 : i32
    %c0_i32_1 = arith.constant 0 : i32
    return %c0_i32, %c0_i32_0 : i32, i32
  }
  func.func @transform_7(%arg0: i32) -> (i32, i32) {
    %c0_i32 = arith.constant 0 : i32
    %c0_i32_0 = arith.constant 0 : i32
    %c0_i32_1 = arith.constant 0 : i32
    return %c0_i32, %c0_i32_0 : i32, i32
  }
  func.func @transform_8(%arg0: i32) -> (i32, i32) {
    %c0_i32 = arith.constant 0 : i32
    %c0_i32_0 = arith.constant 0 : i32
    %c0_i32_1 = arith.constant 0 : i32
    return %c0_i32, %c0_i32_0 : i32, i32
  }
  func.func @transform_9(%arg0: i32) -> (i32, i32) {
    %c0_i32 = arith.constant 0 : i32
    %c0_i32_0 = arith.constant 0 : i32
    return %arg0, %c0_i32 : i32, i32
  }
  func.func @transform_10(%arg0: i32) -> (i32, i32) {
    %c0_i32 = arith.constant 0 : i32
    %c0_i32_0 = arith.constant 0 : i32
    return %arg0, %c0_i32 : i32, i32
  }
}

</mosaic_0001>

<llo_original>
// kernel: tpu_custom_call.1
$region0: #{tpu_custom_call.1}
  #allocation0 [shape = 'u32[]', space=smem, size = 0x4, offset = 0x4, fixed_abs, tag = 'smem constant byte address 0x4 - core index']
  #allocation1 [shape = 'u32[72,128]{1,0:T(1,128)}', space=vmem, size = 0x9000, scoped, tag = 'internal scratch']
  %s0 = inlined_call_operand.vmem [shape: f32[8,16], index: 0, kind: input, shape index: {}]
  %s1 = inlined_call_operand.vmem [shape: bf16[16,32], index: 1, kind: input, shape index: {}]
  %s2 = inlined_call_operand.vmem [shape: f32[1,32], index: 2, kind: input, shape index: {}]
  %s3 = inlined_call_operand.vmem [shape: bf16[32,16], index: 3, kind: input, shape index: {}]
  %s4 = inlined_call_operand.vmem [shape: f32[1,16], index: 4, kind: input, shape index: {}]
  %s5 = inlined_call_operand.vmem [shape: bf16[16,32], index: 5, kind: input, shape index: {}]
  %s6 = inlined_call_operand.vmem [shape: f32[1,32], index: 6, kind: input, shape index: {}]
  %s7 = inlined_call_operand.vmem [shape: bf16[32,16], index: 7, kind: input, shape index: {}]
  %s8 = inlined_call_operand.vmem [shape: f32[1,16], index: 8, kind: input, shape index: {}]
  %s9 = inlined_call_operand.hbm [shape: f32[8,16], index: 9, kind: output, shape index: {0}]
  %s10 = inlined_call_operand.hbm [shape: f32[8,16], index: 10, kind: output, shape index: {1}]
  %11 = xla_tuple %s9, %s10
  %s12 = sld [smem:[#allocation0]]
  $region54: #{tpu_custom_call.1} parent=0
    _
  %s14 = ssub.s32 1, %s12
  %s15 = scalar_select 0, %s14, %s12
  $region1: #{tpu_custom_call.1} parent=0
    #allocation2 [shape = 'u8[4096]{0}', space=vmem, size = 0x1000, scoped, tag = 'output window, operand 0, single buffered']
    #allocation3 [shape = 's32[1]{0}', space=sflag, size = 0x4, scoped, tag = 'scoped memory for tpu_custom_call.1']
    #allocation4 [shape = 'u8[4096]{0}', space=vmem, size = 0x1000, scoped, tag = 'output window, operand 1, single buffered']
    #allocation5 [shape = 's32[1]{0}', space=sflag, size = 0x4, scoped, tag = 'scoped memory for tpu_custom_call.1']
    %16 = vsyncpa [#allocation3], 0
    %17 = vsyncpa [#allocation5], 0
    // Predicated region
    $region2: #{tpu_custom_call.1} parent=1 // pred_check
      _
    $region3: #{tpu_custom_call.1} parent=1 // pred_check_branch
      %19 = sbr.rel (0) target = $region5
    $region4: #{tpu_custom_call.1} parent=1 // pred_region
      _
    $region5: #{tpu_custom_call.1} parent=1 // pred_fallthru
      _
    // Predicated region
    $region6: #{tpu_custom_call.1} parent=1 // pred_check
      _
    $region7: #{tpu_custom_call.1} parent=1 // pred_check_branch
      %21 = sbr.rel (0) target = $region9
    $region8: #{tpu_custom_call.1} parent=1 // pred_region
      _
    $region9: #{tpu_custom_call.1} parent=1 // pred_fallthru
      _
    // Predicated region
    $region10: #{tpu_custom_call.1} parent=1 // pred_check
      _
    $region11: #{tpu_custom_call.1} parent=1 // pred_check_branch
      %23 = sbr.rel (0) target = $region13
    $region12: #{tpu_custom_call.1} parent=1 // pred_region
      _
    $region13: #{tpu_custom_call.1} parent=1 // pred_fallthru
      _
    // Predicated region
    $region14: #{tpu_custom_call.1} parent=1 // pred_check
      _
    $region15: #{tpu_custom_call.1} parent=1 // pred_check_branch
      %25 = sbr.rel (0) target = $region17
    $region16: #{tpu_custom_call.1} parent=1 // pred_region
      _
    $region17: #{tpu_custom_call.1} parent=1 // pred_fallthru
      _
    // Predicated region
    $region18: #{tpu_custom_call.1} parent=1 // pred_check
      _
    $region19: #{tpu_custom_call.1} parent=1 // pred_check_branch
      %27 = sbr.rel (0) target = $region21
    $region20: #{tpu_custom_call.1} parent=1 // pred_region
      _
    $region21: #{tpu_custom_call.1} parent=1 // pred_fallthru
      _
    // Predicated region
    $region22: #{tpu_custom_call.1} parent=1 // pred_check
      _
    $region23: #{tpu_custom_call.1} parent=1 // pred_check_branch
      %29 = sbr.rel (0) target = $region25
    $region24: #{tpu_custom_call.1} parent=1 // pred_region
      _
    $region25: #{tpu_custom_call.1} parent=1 // pred_fallthru
      _
    // Predicated region
    $region26: #{tpu_custom_call.1} parent=1 // pred_check
      _
    $region27: #{tpu_custom_call.1} parent=1 // pred_check_branch
      %31 = sbr.rel (0) target = $region29
    $region28: #{tpu_custom_call.1} parent=1 // pred_region
      _
    $region29: #{tpu_custom_call.1} parent=1 // pred_fallthru
      _
    // Predicated region
    $region30: #{tpu_custom_call.1} parent=1 // pred_check
      _
    $region31: #{tpu_custom_call.1} parent=1 // pred_check_branch
      %33 = sbr.rel (0) target = $region33
    $region32: #{tpu_custom_call.1} parent=1 // pred_region
      _
    $region33: #{tpu_custom_call.1} parent=1 // pred_fallthru
      _
    // Predicated region
    $region34: #{tpu_custom_call.1} parent=1 // pred_check
      _
    $region35: #{tpu_custom_call.1} parent=1 // pred_check_branch
      %35 = sbr.rel (0) target = $region37
    $region36: #{tpu_custom_call.1} parent=1 // pred_region
      _
    $region37: #{tpu_custom_call.1} parent=1 // pred_fallthru
      _
    %v37 = vld [vmem:[%s0] sm:$0xff]
    %v38 = vpack.c.bf16 %v37, %v37
    %v39 = vld [vmem:[%s1] sm:$0xf]
    %v40 = vld [vmem:[%s1 + $0x4] sm:$0xf]
    %v41 = vld [vmem:[%s2] sm:$0x1]
    %v43 = vperm.slane %v41, 0
    %v47 = vunpack.c.l.b16 %v39
    %v48 = vunpack.c.l.b16 %v40
    %v49 = vpack.c.b16 %v48, %v47
    %vm51 = vcmask 130048
    %v53 = vsel %vm51, %v38, 0
    %55 = vmatpush.bf16.msra.mxu0 0
    %56 = vmatpush.bf16.msra.mxu0 0
    %57 = vmatpush.bf16.msra.mxu0 0
    %58 = vmatpush.bf16.msra.mxu0 0
    %59 = vmatpush.bf16.msra.mxu0 0
    %60 = vmatpush.bf16.msra.mxu0 0
    %61 = vmatpush.bf16.msra.mxu0 0
    %62 = vmatpush.bf16.msra.mxu0 %v49
    %63 = vmatmul.bf16.gmra.mxu0 %v53
    %v64 = vpop.f32.mrf.mxu0
    %v65 = vadd.f32 %v43, %v64
    %v66 = vpop.f32.mrf.mxu0
    %67 = vdwg.mxu0
    %v68 = vtanh.pop %v65
    %v69 = vpack.c.bf16 %v68, %v68
    %v70 = vld [vmem:[%s3] sm:$0xf]
    %v71 = vld [vmem:[%s3 + $0x4] sm:$0xf]
    %v72 = vld [vmem:[%s3 + $0x8] sm:$0xf]
    %v73 = vld [vmem:[%s3 + $0xc] sm:$0xf]
    %v74 = vld [vmem:[%s4] sm:$0x1]
    %v76 = vperm.slane %v74, 0
    %v82 = vunpack.c.l.b16 %v70
    %v83 = vunpack.c.l.b16 %v71
    %v84 = vunpack.c.l.b16 %v72
    %v85 = vunpack.c.l.b16 %v73
    %v86 = vpack.c.b16 %v83, %v82
    %v87 = vpack.c.b16 %v85, %v84
    %vm90 = vcmask 261120
    %v92 = vsel %vm90, %v69, 0
    %94 = vmatpush.bf16.msra.mxu0 0
    %95 = vmatpush.bf16.msra.mxu0 0
    %96 = vmatpush.bf16.msra.mxu0 0
    %97 = vmatpush.bf16.msra.mxu0 0
    %98 = vmatpush.bf16.msra.mxu0 0
    %99 = vmatpush.bf16.msra.mxu0 0
    %100 = vmatpush.bf16.msra.mxu0 %v87
    %101 = vmatpush.bf16.msra.mxu0 %v86
    %102 = vmatmul.bf16.gmra.mxu0 %v92
    %v103 = vpop.f32.mrf.mxu0
    %v104 = vadd.f32 %v76, %v103
    %v105 = vpop.f32.mrf.mxu0
    %106 = vdwg.mxu0
    %v107 = vmul.f32 %v104, %v104
    %v108 = vsel %vm51, %v107, 0.0
    %109 = vadd.xlane.f32.xlu0 %v108
    %v110 = vpop.xlane.xlu0 %109
    %v111 = vmax.f32 %v110, 1e-24
    %v112 = vrsqrt.pop %v111
    %v113 = vmul.f32 %v112, %v111
    %v114 = vmul.f32 %v113, %v112
    %v115 = vmul.f32 0.5, %v114
    %v116 = vsub.f32 1.5, %v115
    %v117 = vmul.f32 %v112, %v116
    %vm118 = vweird.f32 %v111
    %vm119 = vweird.f32 %v112
    %vm120 = vmor %vm118, %vm119
    %v121 = vsel %vm120, %v112, %v117
    %v122 = vmul.f32 %v104, %v121
    %v123 = vpack.c.bf16 %v122, %v122
    %v124 = vld [vmem:[%s5] sm:$0xf]
    %v125 = vld [vmem:[%s5 + $0x4] sm:$0xf]
    %v126 = vld [vmem:[%s6] sm:$0x1]
    %v128 = vperm.slane %v126, 0
    %v132 = vunpack.c.l.b16 %v124
    %v133 = vunpack.c.l.b16 %v125
    %v134 = vpack.c.b16 %v133, %v132
    %v137 = vsel %vm51, %v123, 0
    %139 = vmatpush.bf16.msra.mxu0 0
    %140 = vmatpush.bf16.msra.mxu0 0
    %141 = vmatpush.bf16.msra.mxu0 0
    %142 = vmatpush.bf16.msra.mxu0 0
    %143 = vmatpush.bf16.msra.mxu0 0
    %144 = vmatpush.bf16.msra.mxu0 0
    %145 = vmatpush.bf16.msra.mxu0 0
    %146 = vmatpush.bf16.msra.mxu0 %v134
    %147 = vmatmul.bf16.gmra.mxu0 %v137
    %v148 = vpop.f32.mrf.mxu0
    %v149 = vadd.f32 %v128, %v148
    %v150 = vpop.f32.mrf.mxu0
    %151 = vdwg.mxu0
    %v152 = vtanh.pop %v149
    %v153 = vpack.c.bf16 %v152, %v152
    %v154 = vld [vmem:[%s7] sm:$0xf]
    %v155 = vld [vmem:[%s7 + $0x4] sm:$0xf]
    %v156 = vld [vmem:[%s7 + $0x8] sm:$0xf]
    %v157 = vld [vmem:[%s7 + $0xc] sm:$0xf]
    %v158 = vld [vmem:[%s8] sm:$0x1]
    %v160 = vperm.slane %v158, 0
    %v166 = vunpack.c.l.b16 %v154
    %v167 = vunpack.c.l.b16 %v155
    %v168 = vunpack.c.l.b16 %v156
    %v169 = vunpack.c.l.b16 %v157
    %v170 = vpack.c.b16 %v167, %v166
    %v171 = vpack.c.b16 %v169, %v168
    %v175 = vsel %vm90, %v153, 0
    %177 = vmatpush.bf16.msra.mxu0 0
    %178 = vmatpush.bf16.msra.mxu0 0
    %179 = vmatpush.bf16.msra.mxu0 0
    %180 = vmatpush.bf16.msra.mxu0 0
    %181 = vmatpush.bf16.msra.mxu0 0
    %182 = vmatpush.bf16.msra.mxu0 0
    %183 = vmatpush.bf16.msra.mxu0 %v171
    %184 = vmatpush.bf16.msra.mxu0 %v170
    %185 = vmatmul.bf16.gmra.mxu0 %v175
    %v186 = vpop.f32.mrf.mxu0
    %v187 = vadd.f32 %v160, %v186
    %v188 = vpop.f32.mrf.mxu0
    %189 = vdwg.mxu0
    %v190 = vsub.f32 0.0, %v187
    %v191 = vmul.f32 %v190, 1.442695
    %v192 = vpow.pop %v191
    %v193 = vadd.f32 %v192, 1.0
    %v194 = vrcp.pop %v193
    %v195 = vmul.f32 %v193, %v194
    %v196 = vsub.f32 1.0, %v195
    %v197 = vmul.f32 %v194, %v196
    %v198 = vadd.f32 %v194, %v197
    %vm199 = vweird.f32 %v193
    %vm200 = vweird.f32 %v194
    %vm201 = vmor %vm199, %vm200
    %v202 = vsel %vm201, %v194, %v198
    %v203 = vand.u32 2147483647, %v193
    %vm204 = vcmp.eq.f32.partialorder %v203, 8.507059e+37
    %v205 = vand.u32 %v193, 2147483648
    %v206 = vor.u32 1.1754944e-38, %v205
    %v207 = vsel %vm204, %v206, %v202
    %v208 = vmul.f32 1.0, %v207
    %209 = vst.msk [vmem:[#allocation2] sm:$0xff] %vm51, %v208
    %210 = vst.msk [vmem:[#allocation4] sm:$0xff] %vm51, %v122
    // Predicated region
    $region38: #{tpu_custom_call.1} parent=1 // pred_check
      _
    $region39: #{tpu_custom_call.1} parent=1 // pred_check_branch
      %212 = sbr.rel (0) target = $region41
    $region40: #{tpu_custom_call.1} parent=1 // pred_region
      %214 = vsyncadd [#allocation3], 0
      %s216 = sshll.u32 [#allocation2], 4
      %s217 = int_to_ptr.vmem [resolvable:$true] %s216
      %s218 = sshll.u32 %s9, 4
      %s219 = int_to_ptr.hbm [resolvable:$true] %s218
      %221 = dma.vmem_to_hbm [thread:$0]  %s217, 128, %s219, [#allocation3]
    $region41: #{tpu_custom_call.1} parent=1 // pred_fallthru
      _
    // Predicated region
    $region42: #{tpu_custom_call.1} parent=1 // pred_check
      _
    $region43: #{tpu_custom_call.1} parent=1 // pred_check_branch
      %223 = sbr.rel (0) target = $region45
    $region44: #{tpu_custom_call.1} parent=1 // pred_region
      %225 = vsyncadd [#allocation5], 0
      %s227 = sshll.u32 [#allocation4], 4
      %s228 = int_to_ptr.vmem [resolvable:$true] %s227
      %s229 = sshll.u32 %s10, 4
      %s230 = int_to_ptr.hbm [resolvable:$true] %s229
      %232 = dma.vmem_to_hbm [thread:$0]  %s228, 128, %s230, [#allocation5]
    $region45: #{tpu_custom_call.1} parent=1 // pred_fallthru
      _
    // Predicated region
    $region46: #{tpu_custom_call.1} parent=1 // pred_check
      _
    $region47: #{tpu_custom_call.1} parent=1 // pred_check_branch
      %234 = sbr.rel (0) target = $region49
    $region48: #{tpu_custom_call.1} parent=1 // pred_region
      %236 = dma.done [#allocation3], 128
    $region49: #{tpu_custom_call.1} parent=1 // pred_fallthru
      _
    // Predicated region
    $region50: #{tpu_custom_call.1} parent=1 // pred_check
      _
    $region51: #{tpu_custom_call.1} parent=1 // pred_check_branch
      %238 = sbr.rel (0) target = $region53
    $region52: #{tpu_custom_call.1} parent=1 // pred_region
      %240 = dma.done [#allocation5], 128
    $region53: #{tpu_custom_call.1} parent=1 // pred_fallthru
      _
    %241 = vsyncpa [#allocation3], 1
    %242 = vsyncpa [#allocation5], 1

</llo_original>
